<compile_context>
chip_gen: v6e
topology: v6e:2x2x1
jax: 0.10.0
libtpu: 0.0.40
codegen_flags: <defaults>
</compile_context>

<pallas_src>
import functools
import math

import jax
import jax.numpy as jnp
from jax.experimental import pallas as pl
from jax.experimental.pallas import tpu as pltpu


def gfp_kernel(x_ref, w_ref, o_ref, *, emb):
    # x_ref: (TB, 1) f32, w_ref: (1, E) f32, o_ref: (TB, 2E) f32
    two_pi = jnp.float32(2.0 * math.pi)
    x = x_ref[...] * two_pi                 # (TB, 1)  scale the small operand
    w = w_ref[...]                          # (1, E)
    proj = x * w                            # broadcast -> (TB, E), VPU
    # Write sin/cos directly into lane-aligned static slices of the output
    # (E is a multiple of 128) -- no concatenate, no re-packing.
    o_ref[:, :emb] = jnp.sin(proj)
    o_ref[:, emb:] = jnp.cos(proj)


def gaussian_fourier_projection(x, W, *, batch_tile=8):
    """x: (B,) noise levels, W: (E,) fixed Gaussian weights -> (B, 2E)."""
    B = x.shape[0]
    E = W.shape[0]
    TB = batch_tile
    B_pad = ((B + TB - 1) // TB) * TB

    # Lift to TPU-friendly 2D shapes; pad batch to a sublane multiple.
    x2 = jnp.zeros((B_pad, 1), jnp.float32).at[:B, 0].set(x.astype(jnp.float32))
    w2 = W.astype(jnp.float32).reshape(1, E)

    grid = (B_pad // TB,)
    cost = pl.CostEstimate(
        flops=2 * B_pad * E,                      # one mul per element of proj (+ scale)
        transcendentals=2 * B_pad * E,            # sin + cos
        bytes_accessed=4 * (B_pad + E + B_pad * 2 * E),
    )

    out = pl.pallas_call(
        functools.partial(gfp_kernel, emb=E),
        out_shape=jax.ShapeDtypeStruct((B_pad, 2 * E), jnp.float32),
        grid_spec=pltpu.PrefetchScalarGridSpec(
            num_scalar_prefetch=0,
            grid=grid,
            in_specs=[
                pl.BlockSpec((TB, 1), lambda i: (i, 0)),   # batch tile of x
                pl.BlockSpec((1, E), lambda i: (0, 0)),    # full W, resident every step
            ],
            out_specs=pl.BlockSpec((TB, 2 * E), lambda i: (i, 0)),
        ),
        compiler_params=pltpu.CompilerParams(
            dimension_semantics=("parallel",),             # megacore sharding on v7x
        ),
        cost_estimate=cost,
    )(x2, w2)
    return out[:B]


def ref_forward(x, W):
    """Pure-JAX reference matching the PyTorch module exactly."""
    x_proj = x[:, None] * W[None, :] * 2.0 * math.pi
    return jnp.concatenate([jnp.sin(x_proj), jnp.cos(x_proj)], axis=-1)


if __name__ == "__main__":
    embedding_size = 256     # module default
    scale = 1.0
    B = 16                   # two batch tiles -> grid=(2,), both v7x cores busy

    key = jax.random.PRNGKey(0)
    k1, k2 = jax.random.split(key, 2)
    # Fixed (non-trainable) Gaussian weights, as in the module's __init__.
    W = jax.random.normal(k1, (embedding_size,), jnp.float32) * scale
    # Noise levels (the module is typically called with positive sigmas).
    x = jnp.abs(jax.random.normal(k2, (B,), jnp.float32)) + 0.1

    y = gaussian_fourier_projection(x, W)
    y = jax.block_until_ready(y)

    y_ref = ref_forward(x, W)
    max_err = float(jnp.max(jnp.abs(y - y_ref)))
    assert y.shape == (B, 2 * embedding_size), y.shape
    assert jnp.allclose(y, y_ref, atol=1e-5, rtol=1e-5), f"max abs err {max_err}"
    print("KERNEL_OK")
</pallas_src>

<mosaic_0001>
module attributes {stable_mosaic.version = 11 : i64} {
  func.func @gfp_kernel(%arg0: i32, %arg1: memref<8x1xf32, #tpu.memory_space<vmem>>, %arg2: memref<1x256xf32, #tpu.memory_space<vmem>>, %arg3: memref<8x512xf32, #tpu.memory_space<vmem>>) attributes {dimension_semantics = [#tpu.dimension_semantics<parallel>], iteration_bounds = array<i64: 2>, scalar_prefetch = 0 : i64, scratch_operands = 0 : i64, tpu.core_type = #tpu.core_type<tc>, window_params = [{transform_indices = @transform_0, window_bounds = array<i64: 8, 1>}, {pipeline_mode = #tpu.pipeline_mode<synchronous>, transform_indices = @transform_1, window_bounds = array<i64: 1, 256>}, {transform_indices = @transform_2, window_bounds = array<i64: 8, 512>}]} {
    %c0 = arith.constant 0 : index
    %c0_0 = arith.constant 0 : index
    %0 = vector.load %arg1[%c0, %c0_0] : memref<8x1xf32, #tpu.memory_space<vmem>>, vector<8x1xf32>
    %cst = arith.constant 6.28318548 : f32
    %1 = vector.broadcast %cst : f32 to vector<8x1xf32>
    %2 = arith.mulf %0, %1 : vector<8x1xf32>
    %c0_1 = arith.constant 0 : index
    %c0_2 = arith.constant 0 : index
    %3 = vector.load %arg2[%c0_1, %c0_2] : memref<1x256xf32, #tpu.memory_space<vmem>>, vector<1x256xf32>
    %4 = vector.broadcast %2 : vector<8x1xf32> to vector<8x256xf32>
    %5 = vector.broadcast %3 : vector<1x256xf32> to vector<8x256xf32>
    %6 = arith.mulf %4, %5 : vector<8x256xf32>
    %7 = math.sin %6 : vector<8x256xf32>
    %c0_3 = arith.constant 0 : index
    %c0_4 = arith.constant 0 : index
    %8 = vector.load %arg3[%c0_3, %c0_4] : memref<8x512xf32, #tpu.memory_space<vmem>>, vector<8x256xf32>
    tpu.vector_store %arg3[%c0_3, %c0_4], %7 {strides = array<i32>} : memref<8x512xf32, #tpu.memory_space<vmem>>, vector<8x256xf32>,
    %9 = math.cos %6 : vector<8x256xf32>
    %c0_5 = arith.constant 0 : index
    %c256 = arith.constant 256 : index
    %10 = vector.load %arg3[%c0_5, %c256] : memref<8x512xf32, #tpu.memory_space<vmem>>, vector<8x256xf32>
    tpu.vector_store %arg3[%c0_5, %c256], %9 {strides = array<i32>} : memref<8x512xf32, #tpu.memory_space<vmem>>, vector<8x256xf32>,
    return
  }
  func.func @transform_0(%arg0: i32) -> (i32, i32) {
    %c0_i32 = arith.constant 0 : i32
    %c0_i32_0 = arith.constant 0 : i32
    return %arg0, %c0_i32 : i32, i32
  }
  func.func @transform_1(%arg0: i32) -> (i32, i32) {
    %c0_i32 = arith.constant 0 : i32
    %c0_i32_0 = arith.constant 0 : i32
    %c0_i32_1 = arith.constant 0 : i32
    return %c0_i32, %c0_i32_0 : i32, i32
  }
  func.func @transform_2(%arg0: i32) -> (i32, i32) {
    %c0_i32 = arith.constant 0 : i32
    %c0_i32_0 = arith.constant 0 : i32
    return %arg0, %c0_i32 : i32, i32
  }
}

</mosaic_0001>

<llo_original>
// kernel: tpu_custom_call.1
$region0: #{tpu_custom_call.1}
  #allocation0 [shape = 'u32[]', space=smem, size = 0x4, offset = 0x4, fixed_abs, tag = 'smem constant byte address 0x4 - core index']
  #allocation1 [shape = 'u32[144,128]{1,0:T(1,128)}', space=vmem, size = 0x12000, scoped, tag = 'internal scratch']
  %s0 = inlined_call_operand.vmem [shape: f32[16,1], index: 0, kind: input, shape index: {}]
  %s1 = inlined_call_operand.vmem [shape: f32[1,256], index: 1, kind: input, shape index: {}]
  %s2 = inlined_call_operand.hbm [shape: f32[16,512], index: 2, kind: output, shape index: {}]
  %s3 = sld [smem:[#allocation0]]
  $region41: #{tpu_custom_call.1} parent=0
    _
  %s5 = ssub.s32 1, %s3
  %s6 = scalar_select 0, %s5, %s3
  $region1: #{tpu_custom_call.1} parent=0
    #allocation2 [shape = 'u8[32768]{0}', space=vmem, size = 0x8000, scoped, tag = 'output window, operand 0']
    #allocation3 [shape = 's32[2]{0}', space=sflag, size = 0x8, scoped, tag = 'scoped memory for tpu_custom_call.1']
    %7 = vsyncpa [#allocation3], 0
    %s8 = scalar_lea.sflag [#allocation3], 1
    %9 = vsyncpa %s8, 0
    loop: start=0, step=1, limit=4
    $region2: #{tpu_custom_call.1} parent=1 // loop_pre_header
      _
    $region3: #{tpu_custom_call.1} parent=1 // loop_header
      %s11 = sphi 0, %s15
      %p12 = scmp.ge.s32.totalorder %s11, 4
      %s21 = sphi 0, %s23
      %s24 = sphi 0, %s21
      %s25 = sphi 0, %s24
      %s41 = sphi 0, %s25
      %s45 = sphi 0, %s45
      %s47 = sphi 0, %s45
      %s48 = sphi 0, %s47
      %s62 = sphi 0, %s48
      %s68 = sphi 0, %s70
      %s71 = sphi 0, %s68
      %s72 = sphi 0, %s71
      %s88 = sphi 0, %s72
    $region4: #{tpu_custom_call.1} parent=1 // loop_header_branch
      %14 = sbr.rel (%p12) target = $region8
    $region5: #{tpu_custom_call.1} parent=1 // loop_body
      %s16 = ssub.s32 %s11, 1
      %s17 = ssub.s32 %s11, 2
      %s18 = sadd.s32 %s11, 1
      %s19 = ssub.s32 %s11, %s18
      %p20 = scmp.eq.s32.totalorder %s19, 0
      %s22 = sadd.s32 %s21, 1
      %s23 = scalar_select %p20, %s21, %s22
      %p26 = pneg %p20
      %p27 = scmp.eq.s32.totalorder %s11, 1
      %p28 = por %p26, %p27
      %p29 = scmp.ne.s32.totalorder %s21, %s24
      %p30 = scmp.eq.s32.totalorder %s11, 0
      %p31 = por %p29, %p30
      %p32 = scmp.ne.s32.totalorder %s21, %s24
      %p33 = scmp.eq.s32.totalorder %s16, 1
      %p34 = por %p32, %p33
      %p35 = scmp.ne.s32.totalorder %s24, %s25
      %p36 = scmp.eq.s32.totalorder %s16, 0
      %p37 = por %p35, %p36
      %p38 = scmp.ne.s32.totalorder %s24, %s25
      %p39 = scmp.eq.s32.totalorder %s17, 1
      %p40 = por %p38, %p39
      %p42 = scmp.ne.s32.totalorder %s25, %s41
      %p43 = scmp.eq.s32.totalorder %s17, 0
      %p44 = por %p42, %p43
      %s46 = sadd.s32 %s45, 1
      %p49 = scmp.eq.s32.totalorder %s11, 1
      %p50 = scmp.ne.s32.totalorder %s45, %s47
      %p51 = scmp.eq.s32.totalorder %s11, 0
      %p52 = por %p50, %p51
      %p53 = scmp.ne.s32.totalorder %s45, %s47
      %p54 = scmp.eq.s32.totalorder %s16, 1
      %p55 = por %p53, %p54
      %p56 = scmp.ne.s32.totalorder %s47, %s48
      %p57 = scmp.eq.s32.totalorder %s16, 0
      %p58 = por %p56, %p57
      %p59 = scmp.ne.s32.totalorder %s47, %s48
      %p60 = scmp.eq.s32.totalorder %s17, 1
      %p61 = por %p59, %p60
      %p63 = scmp.ne.s32.totalorder %s48, %s62
      %p64 = scmp.eq.s32.totalorder %s17, 0
      %p65 = por %p63, %p64
      %s66 = ssub.s32 %s11, %s18
      %p67 = scmp.eq.s32.totalorder %s66, 0
      %s69 = sadd.s32 %s68, 1
      %s70 = scalar_select %p67, %s68, %s69
      %p73 = pneg %p67
      %p74 = scmp.eq.s32.totalorder %s11, 1
      %p75 = por %p73, %p74
      %p76 = scmp.ne.s32.totalorder %s68, %s71
      %p77 = scmp.eq.s32.totalorder %s11, 0
      %p78 = por %p76, %p77
      %p79 = scmp.ne.s32.totalorder %s68, %s71
      %p80 = scmp.eq.s32.totalorder %s16, 1
      %p81 = por %p79, %p80
      %p82 = scmp.ne.s32.totalorder %s71, %s72
      %p83 = scmp.eq.s32.totalorder %s16, 0
      %p84 = por %p82, %p83
      %p85 = scmp.ne.s32.totalorder %s71, %s72
      %p86 = scmp.eq.s32.totalorder %s17, 1
      %p87 = por %p85, %p86
      %p89 = scmp.ne.s32.totalorder %s72, %s88
      %p90 = scmp.eq.s32.totalorder %s17, 0
      %p91 = por %p89, %p90
      %p92 = scmp.le.s32.totalorder 1, %s11
      %p93 = scmp.lt.s32.totalorder %s11, 3
      %p94 = pnand %p92, %p93
      %p95 = pneg %p94
      // Predicated region
      $region9: #{tpu_custom_call.1} parent=5 // pred_check
        _
      $region10: #{tpu_custom_call.1} parent=5 // pred_check_branch
        %97 = sbr.rel (%p94) target = $region12
      $region11: #{tpu_custom_call.1} parent=5 // pred_region
        %s98 = ssub.s32 %s11, 1
        // Predicated region
        $region13: #{tpu_custom_call.1} parent=11 // pred_check
          %p99 = pneg %p58
        $region14: #{tpu_custom_call.1} parent=11 // pred_check_branch
          %101 = sbr.rel (%p99) target = $region16
        $region15: #{tpu_custom_call.1} parent=11 // pred_region
          _
        $region16: #{tpu_custom_call.1} parent=11 // pred_fallthru
          _
      $region12: #{tpu_custom_call.1} parent=5 // pred_fallthru
        _
      %p102 = scmp.lt.s32.totalorder %s11, 2
      // Predicated region
      $region17: #{tpu_custom_call.1} parent=5 // pred_check
        %p103 = pneg %p102
      $region18: #{tpu_custom_call.1} parent=5 // pred_check_branch
        %105 = sbr.rel (%p103) target = $region20
      $region19: #{tpu_custom_call.1} parent=5 // pred_region
        // Predicated region
        $region21: #{tpu_custom_call.1} parent=19 // pred_check
          %p106 = pneg %p31
        $region22: #{tpu_custom_call.1} parent=19 // pred_check_branch
          %108 = sbr.rel (%p106) target = $region24
        $region23: #{tpu_custom_call.1} parent=19 // pred_region
          %p109 = scmp.lt.s32.totalorder %s11, 1
          %s110 = scalar_select %p109, %s11, 1
          %s111 = smul.addr %s110, 8
          %s112 = scalar_lea.vmem %s0, %s111
        $region24: #{tpu_custom_call.1} parent=19 // pred_fallthru
          _
      $region20: #{tpu_custom_call.1} parent=5 // pred_fallthru
        _
      %p113 = scmp.le.s32.totalorder 1, %s11
      %p114 = scmp.lt.s32.totalorder %s11, 3
      %p115 = pnand %p113, %p114
      %p116 = pneg %p115
      // Predicated region
      $region25: #{tpu_custom_call.1} parent=5 // pred_check
        _
      $region26: #{tpu_custom_call.1} parent=5 // pred_check_branch
        %118 = sbr.rel (%p115) target = $region28
      $region27: #{tpu_custom_call.1} parent=5 // pred_region
        %s119 = ssub.s32 %s11, 1
        %p120 = scmp.lt.s32.totalorder %s16, 1
        %s121 = scalar_select %p120, %s16, 1
        %s122 = smul.addr %s121, 8
        %s123 = scalar_lea.vmem %s0, %s122
        %p124 = pneg %p37
        %p125 = pneg %p34
        %p126 = pneg %p58
        %p127 = pneg %p55
        %p128 = pneg %p84
        %p129 = pneg %p81
        %s130 = sand.u32 %s71, 1
        %s131 = scalar_lea.sflag [#allocation3], %s130
        %s132 = sand.u32 %s71, 1
        %s133 = smul.addr %s132, 32
        %s134 = scalar_lea.vmem [#allocation2], %s133
        %p135 = scmp.lt.s32.totalorder %s16, 1
        %s136 = scalar_select %p135, %s16, 1
        %s137 = smul.addr %s136, 8
        %s138 = scalar_lea.vmem %s0, %s137
        %v139 = vld [vmem:[%s138] sm:$0xff]
        %v140 = vmul.f32 %v139, 6.2831855
        %v141 = vld [vmem:[%s1] sm:$0x3]
        %143 = vset.pattern.permute.xlu0 0
        %144 = vperm.xlu0 %143, %v140
        %v145 = vpop.permute.xlu0 %144
        %v148 = vlaneseq
        %v149 = vshrl.u32 %v148, 7
        %v150 = vsub.s32 0, %v149
        %v151 = vrot.slane %v141, %v150
        %v152 = vlaneseq
        %v153 = vshrl.u32 %v152, 7
        %v154 = vsub.s32 1, %v153
        %v155 = vrot.slane %v141, %v154
        %v158 = vmul.f32 %v145, %v151
        %v159 = vmul.f32 %v145, %v155
        %v160 = vand.u32 2147483647, %v158
        %vm161 = vcmp.le.f32.partialorder %v160, 0.7853982
        %vm162 = vcmp.lt.s32.totalorder %v158, 0
        %v163 = vand.u32 %v158, 2139095040
        %v164 = vshrl.u32 %v163, 23
        %v165 = vsub.s32 %v164, 127
        %v166 = vand.u32 2147483647, %v158
        %v167 = vand.u32 %v166, 8388607
        %v168 = vor.u32 %v167, 8388608
        %v169 = vsub.s32 0, %v168
        %v170 = vadd.s32 %v165, 1
        %vm171 = vcmp.gt.s32.totalorder %v170, 0
        %v172 = vsel %vm171, %v170, 0
        %v173 = vshrl.u32 %v172, 5
        %v174 = vand.u32 %v172, 31
        %v175 = vsub.s32 32, %v174
        %v176 = vshrl.u32 683565275, %v175
        %v177 = vshll.u32 683565275, %v174
        %v178 = vshrl.u32 2475754826, %v175
        %v179 = vor.u32 %v177, %v178
        %v180 = vshll.u32 2475754826, %v174
        %v181 = vshrl.u32 2131351028, %v175
        %v182 = vor.u32 %v180, %v181
        %v183 = vshll.u32 2131351028, %v174
        %v184 = vshrl.u32 2102212464, %v175
        %v185 = vor.u32 %v183, %v184
        %v186 = vshll.u32 2102212464, %v174
        %v187 = vshrl.u32 920167782, %v175
        %v188 = vor.u32 %v186, %v187
        %v189 = vshll.u32 920167782, %v174
        %v190 = vshrl.u32 1326507024, %v175
        %v191 = vor.u32 %v189, %v190
        %vm192 = vcmp.lt.s32.totalorder %v173, 1
        %vm193 = vcmp.lt.s32.totalorder %v173, 2
        %vm194 = vcmp.lt.s32.totalorder %v173, 3
        %vm195 = vcmp.lt.s32.totalorder %v173, 4
        %v196 = vsel %vm192, %v176, %v179
        %v197 = vsel %vm195, %v185, 2102212464
        %v198 = vsel %vm194, %v182, %v197
        %v199 = vsel %vm193, %v196, %v198
        %v200 = vsel %vm192, %v179, %v182
        %v201 = vsel %vm195, %v188, 920167782
        %v202 = vsel %vm194, %v185, %v201
        %v203 = vsel %vm193, %v200, %v202
        %v204 = vsel %vm192, %v182, %v185
        %v205 = vsel %vm195, %v191, 1326507024
        %v206 = vsel %vm194, %v188, %v205
        %v207 = vsel %vm193, %v204, %v206
        %v208 = vshll.u32 %v168, 8
        %v209 = vmul.u32.u64.compose %v208, %v207
        %v210 = vextract.low.u32 %v209
        %v211 = vextract.high.u32 %v209
        %v212 = vmul.u32.u64.compose %v208, %v203
        %v213 = vextract.low.u32 %v212
        %v214 = vextract.high.u32 %v212
        %v215 = vmul.u32 %v208, %v199
        %v216 = vadd.s32 %v211, %v213
        %vm217 = vc.u32 %v211, %v213
        %v218 = vadd.s32 %v214, 1
        %v219 = vsel %vm217, %v218, %v214
        %v220 = vadd.s32 %v215, %v219
        %v221 = vadd.s32 %v220, 536870912
        %v222 = vshrl.u32 %v221, 30
        %v223 = vshll.u32 %v222, 30
        %v224 = vsub.s32 %v220, %v223
        %vm225 = vcmp.lt.s32.totalorder %v224, 0
        %v226 = vsub.s32 0, %v224
        %v227 = vsel %vm225, %v226, %v224
        %v228 = vclz %v227
        %v229 = vsub.s32 %v228, 2
        %vm230 = vcmp.gt.s32.totalorder 0, %v229
        %v231 = vsel %vm230, 0, %v229
        %v232 = vsub.s32 32, %v231
        %v233 = vshll.u32 %v224, %v231
        %v234 = vshrl.u32 %v216, %v232
        %v235 = vor.u32 %v233, %v234
        %v236 = vsub.s32 4294967266, %v231
        %v237 = vadd.s32 %v236, 127
        %v238 = vshll.u32 %v237, 23
        %v239 = vor.u32 4788187, %v238
        %v240 = vand.u32 2147483647, %v239
        %v242 = vcvt.s32.f32 %v235
        %v243 = vmul.f32 %v242, %v240
        %v244 = vxor.u32 %v243, 2147483648
        %v245 = vsel %vm162, %v244, %v243
        %v246 = vsub.s32 4, %v222
        %v247 = vsel %vm162, %v246, %v222
        %v248 = vsel %vm161, %v158, %v245
        %v249 = vsel %vm161, 0, %v247
        %v250 = vcosq.f32.pop %v248
        %v251 = vsinq.f32.pop %v248
        %vm252 = vweird.f32 %v158
        %v253 = vadd.s32 %v249, 3
        %v254 = vand.u32 %v253, 3
        %vm255 = vcmp.lt.s32.totalorder %v254, 2
        %vm256 = vcmp.eq.s32.totalorder %v254, 0
        %v257 = vxor.u32 %v251, 2147483648
        %v258 = vsel %vm256, %v250, %v257
        %vm259 = vcmp.eq.s32.totalorder %v254, 2
        %v260 = vxor.u32 %v250, 2147483648
        %v261 = vsel %vm259, %v260, %v251
        %v262 = vsel %vm255, %v258, %v261
        %v263 = vsel %vm252, nan, %v262
        %v264 = vand.u32 2147483647, %v159
        %vm265 = vcmp.le.f32.partialorder %v264, 0.7853982
        %vm266 = vcmp.lt.s32.totalorder %v159, 0
        %v267 = vand.u32 %v159, 2139095040
        %v268 = vshrl.u32 %v267, 23
        %v269 = vsub.s32 %v268, 127
        %v270 = vand.u32 2147483647, %v159
        %v271 = vand.u32 %v270, 8388607
        %v272 = vor.u32 %v271, 8388608
        %v273 = vsub.s32 0, %v272
        %v274 = vadd.s32 %v269, 1
        %vm275 = vcmp.gt.s32.totalorder %v274, 0
        %v276 = vsel %vm275, %v274, 0
        %v277 = vshrl.u32 %v276, 5
        %v278 = vand.u32 %v276, 31
        %v279 = vsub.s32 32, %v278
        %v280 = vshrl.u32 683565275, %v279
        %v281 = vshll.u32 683565275, %v278
        %v282 = vshrl.u32 2475754826, %v279
        %v283 = vor.u32 %v281, %v282
        %v284 = vshll.u32 2475754826, %v278
        %v285 = vshrl.u32 2131351028, %v279
        %v286 = vor.u32 %v284, %v285
        %v287 = vshll.u32 2131351028, %v278
        %v288 = vshrl.u32 2102212464, %v279
        %v289 = vor.u32 %v287, %v288
        %v290 = vshll.u32 2102212464, %v278
        %v291 = vshrl.u32 920167782, %v279
        %v292 = vor.u32 %v290, %v291
        %v293 = vshll.u32 920167782, %v278
        %v294 = vshrl.u32 1326507024, %v279
        %v295 = vor.u32 %v293, %v294
        %vm296 = vcmp.lt.s32.totalorder %v277, 1
        %vm297 = vcmp.lt.s32.totalorder %v277, 2
        %vm298 = vcmp.lt.s32.totalorder %v277, 3
        %vm299 = vcmp.lt.s32.totalorder %v277, 4
        %v300 = vsel %vm296, %v280, %v283
        %v301 = vsel %vm299, %v289, 2102212464
        %v302 = vsel %vm298, %v286, %v301
        %v303 = vsel %vm297, %v300, %v302
        %v304 = vsel %vm296, %v283, %v286
        %v305 = vsel %vm299, %v292, 920167782
        %v306 = vsel %vm298, %v289, %v305
        %v307 = vsel %vm297, %v304, %v306
        %v308 = vsel %vm296, %v286, %v289
        %v309 = vsel %vm299, %v295, 1326507024
        %v310 = vsel %vm298, %v292, %v309
        %v311 = vsel %vm297, %v308, %v310
        %v312 = vshll.u32 %v272, 8
        %v313 = vmul.u32.u64.compose %v312, %v311
        %v314 = vextract.low.u32 %v313
        %v315 = vextract.high.u32 %v313
        %v316 = vmul.u32.u64.compose %v312, %v307
        %v317 = vextract.low.u32 %v316
        %v318 = vextract.high.u32 %v316
        %v319 = vmul.u32 %v312, %v303
        %v320 = vadd.s32 %v315, %v317
        %vm321 = vc.u32 %v315, %v317
        %v322 = vadd.s32 %v318, 1
        %v323 = vsel %vm321, %v322, %v318
        %v324 = vadd.s32 %v319, %v323
        %v325 = vadd.s32 %v324, 536870912
        %v326 = vshrl.u32 %v325, 30
        %v327 = vshll.u32 %v326, 30
        %v328 = vsub.s32 %v324, %v327
        %vm329 = vcmp.lt.s32.totalorder %v328, 0
        %v330 = vsub.s32 0, %v328
        %v331 = vsel %vm329, %v330, %v328
        %v332 = vclz %v331
        %v333 = vsub.s32 %v332, 2
        %vm334 = vcmp.gt.s32.totalorder 0, %v333
        %v335 = vsel %vm334, 0, %v333
        %v336 = vsub.s32 32, %v335
        %v337 = vshll.u32 %v328, %v335
        %v338 = vshrl.u32 %v320, %v336
        %v339 = vor.u32 %v337, %v338
        %v340 = vsub.s32 4294967266, %v335
        %v341 = vadd.s32 %v340, 127
        %v342 = vshll.u32 %v341, 23
        %v343 = vor.u32 4788187, %v342
        %v344 = vand.u32 2147483647, %v343
        %v346 = vcvt.s32.f32 %v339
        %v347 = vmul.f32 %v346, %v344
        %v348 = vxor.u32 %v347, 2147483648
        %v349 = vsel %vm266, %v348, %v347
        %v350 = vsub.s32 4, %v326
        %v351 = vsel %vm266, %v350, %v326
        %v352 = vsel %vm265, %v159, %v349
        %v353 = vsel %vm265, 0, %v351
        %v354 = vcosq.f32.pop %v352
        %v355 = vsinq.f32.pop %v352
        %vm356 = vweird.f32 %v159
        %v357 = vadd.s32 %v353, 3
        %v358 = vand.u32 %v357, 3
        %vm359 = vcmp.lt.s32.totalorder %v358, 2
        %vm360 = vcmp.eq.s32.totalorder %v358, 0
        %v361 = vxor.u32 %v355, 2147483648
        %v362 = vsel %vm360, %v354, %v361
        %vm363 = vcmp.eq.s32.totalorder %v358, 2
        %v364 = vxor.u32 %v354, 2147483648
        %v365 = vsel %vm363, %v364, %v355
        %v366 = vsel %vm359, %v362, %v365
        %v367 = vsel %vm356, nan, %v366
        %368 = vst [vmem:[%s134] sm:$0xff] %v263
        %369 = vst [vmem:[%s134 + $0x8] sm:$0xff] %v367
        %v370 = vand.u32 2147483647, %v158
        %vm371 = vcmp.le.f32.partialorder %v370, 0.7853982
        %vm372 = vcmp.lt.s32.totalorder %v158, 0
        %v373 = vand.u32 %v158, 2139095040
        %v374 = vshrl.u32 %v373, 23
        %v375 = vsub.s32 %v374, 127
        %v376 = vand.u32 2147483647, %v158
        %v377 = vand.u32 %v376, 8388607
        %v378 = vor.u32 %v377, 8388608
        %v379 = vsub.s32 0, %v378
        %v380 = vadd.s32 %v375, 1
        %vm381 = vcmp.gt.s32.totalorder %v380, 0
        %v382 = vsel %vm381, %v380, 0
        %v383 = vshrl.u32 %v382, 5
        %v384 = vand.u32 %v382, 31
        %v385 = vsub.s32 32, %v384
        %v386 = vshrl.u32 683565275, %v385
        %v387 = vshll.u32 683565275, %v384
        %v388 = vshrl.u32 2475754826, %v385
        %v389 = vor.u32 %v387, %v388
        %v390 = vshll.u32 2475754826, %v384
        %v391 = vshrl.u32 2131351028, %v385
        %v392 = vor.u32 %v390, %v391
        %v393 = vshll.u32 2131351028, %v384
        %v394 = vshrl.u32 2102212464, %v385
        %v395 = vor.u32 %v393, %v394
        %v396 = vshll.u32 2102212464, %v384
        %v397 = vshrl.u32 920167782, %v385
        %v398 = vor.u32 %v396, %v397
        %v399 = vshll.u32 920167782, %v384
        %v400 = vshrl.u32 1326507024, %v385
        %v401 = vor.u32 %v399, %v400
        %vm402 = vcmp.lt.s32.totalorder %v383, 1
        %vm403 = vcmp.lt.s32.totalorder %v383, 2
        %vm404 = vcmp.lt.s32.totalorder %v383, 3
        %vm405 = vcmp.lt.s32.totalorder %v383, 4
        %v406 = vsel %vm402, %v386, %v389
        %v407 = vsel %vm405, %v395, 2102212464
        %v408 = vsel %vm404, %v392, %v407
        %v409 = vsel %vm403, %v406, %v408
        %v410 = vsel %vm402, %v389, %v392
        %v411 = vsel %vm405, %v398, 920167782
        %v412 = vsel %vm404, %v395, %v411
        %v413 = vsel %vm403, %v410, %v412
        %v414 = vsel %vm402, %v392, %v395
        %v415 = vsel %vm405, %v401, 1326507024
        %v416 = vsel %vm404, %v398, %v415
        %v417 = vsel %vm403, %v414, %v416
        %v418 = vshll.u32 %v378, 8
        %v419 = vmul.u32.u64.compose %v418, %v417
        %v420 = vextract.low.u32 %v419
        %v421 = vextract.high.u32 %v419
        %v422 = vmul.u32.u64.compose %v418, %v413
        %v423 = vextract.low.u32 %v422
        %v424 = vextract.high.u32 %v422
        %v425 = vmul.u32 %v418, %v409
        %v426 = vadd.s32 %v421, %v423
        %vm427 = vc.u32 %v421, %v423
        %v428 = vadd.s32 %v424, 1
        %v429 = vsel %vm427, %v428, %v424
        %v430 = vadd.s32 %v425, %v429
        %v431 = vadd.s32 %v430, 536870912
        %v432 = vshrl.u32 %v431, 30
        %v433 = vshll.u32 %v432, 30
        %v434 = vsub.s32 %v430, %v433
        %vm435 = vcmp.lt.s32.totalorder %v434, 0
        %v436 = vsub.s32 0, %v434
        %v437 = vsel %vm435, %v436, %v434
        %v438 = vclz %v437
        %v439 = vsub.s32 %v438, 2
        %vm440 = vcmp.gt.s32.totalorder 0, %v439
        %v441 = vsel %vm440, 0, %v439
        %v442 = vsub.s32 32, %v441
        %v443 = vshll.u32 %v434, %v441
        %v444 = vshrl.u32 %v426, %v442
        %v445 = vor.u32 %v443, %v444
        %v446 = vsub.s32 4294967266, %v441
        %v447 = vadd.s32 %v446, 127
        %v448 = vshll.u32 %v447, 23
        %v449 = vor.u32 4788187, %v448
        %v450 = vand.u32 2147483647, %v449
        %v452 = vcvt.s32.f32 %v445
        %v453 = vmul.f32 %v452, %v450
        %v454 = vxor.u32 %v453, 2147483648
        %v455 = vsel %vm372, %v454, %v453
        %v456 = vsub.s32 4, %v432
        %v457 = vsel %vm372, %v456, %v432
        %v458 = vsel %vm371, %v158, %v455
        %v459 = vsel %vm371, 0, %v457
        %v460 = vcosq.f32.pop %v458
        %v461 = vsinq.f32.pop %v458
        %vm462 = vweird.f32 %v158
        %v463 = vand.u32 %v459, 3
        %vm464 = vcmp.lt.s32.totalorder %v463, 2
        %vm465 = vcmp.eq.s32.totalorder %v463, 0
        %v466 = vxor.u32 %v461, 2147483648
        %v467 = vsel %vm465, %v460, %v466
        %vm468 = vcmp.eq.s32.totalorder %v463, 2
        %v469 = vxor.u32 %v460, 2147483648
        %v470 = vsel %vm468, %v469, %v461
        %v471 = vsel %vm464, %v467, %v470
        %v472 = vsel %vm462, nan, %v471
        %v473 = vand.u32 2147483647, %v159
        %vm474 = vcmp.le.f32.partialorder %v473, 0.7853982
        %vm475 = vcmp.lt.s32.totalorder %v159, 0
        %v476 = vand.u32 %v159, 2139095040
        %v477 = vshrl.u32 %v476, 23
        %v478 = vsub.s32 %v477, 127
        %v479 = vand.u32 2147483647, %v159
        %v480 = vand.u32 %v479, 8388607
        %v481 = vor.u32 %v480, 8388608
        %v482 = vsub.s32 0, %v481
        %v483 = vadd.s32 %v478, 1
        %vm484 = vcmp.gt.s32.totalorder %v483, 0
        %v485 = vsel %vm484, %v483, 0
        %v486 = vshrl.u32 %v485, 5
        %v487 = vand.u32 %v485, 31
        %v488 = vsub.s32 32, %v487
        %v489 = vshrl.u32 683565275, %v488
        %v490 = vshll.u32 683565275, %v487
        %v491 = vshrl.u32 2475754826, %v488
        %v492 = vor.u32 %v490, %v491
        %v493 = vshll.u32 2475754826, %v487
        %v494 = vshrl.u32 2131351028, %v488
        %v495 = vor.u32 %v493, %v494
        %v496 = vshll.u32 2131351028, %v487
        %v497 = vshrl.u32 2102212464, %v488
        %v498 = vor.u32 %v496, %v497
        %v499 = vshll.u32 2102212464, %v487
        %v500 = vshrl.u32 920167782, %v488
        %v501 = vor.u32 %v499, %v500
        %v502 = vshll.u32 920167782, %v487
        %v503 = vshrl.u32 1326507024, %v488
        %v504 = vor.u32 %v502, %v503
        %vm505 = vcmp.lt.s32.totalorder %v486, 1
        %vm506 = vcmp.lt.s32.totalorder %v486, 2
        %vm507 = vcmp.lt.s32.totalorder %v486, 3
        %vm508 = vcmp.lt.s32.totalorder %v486, 4
        %v509 = vsel %vm505, %v489, %v492
        %v510 = vsel %vm508, %v498, 2102212464
        %v511 = vsel %vm507, %v495, %v510
        %v512 = vsel %vm506, %v509, %v511
        %v513 = vsel %vm505, %v492, %v495
        %v514 = vsel %vm508, %v501, 920167782
        %v515 = vsel %vm507, %v498, %v514
        %v516 = vsel %vm506, %v513, %v515
        %v517 = vsel %vm505, %v495, %v498
        %v518 = vsel %vm508, %v504, 1326507024
        %v519 = vsel %vm507, %v501, %v518
        %v520 = vsel %vm506, %v517, %v519
        %v521 = vshll.u32 %v481, 8
        %v522 = vmul.u32.u64.compose %v521, %v520
        %v523 = vextract.low.u32 %v522
        %v524 = vextract.high.u32 %v522
        %v525 = vmul.u32.u64.compose %v521, %v516
        %v526 = vextract.low.u32 %v525
        %v527 = vextract.high.u32 %v525
        %v528 = vmul.u32 %v521, %v512
        %v529 = vadd.s32 %v524, %v526
        %vm530 = vc.u32 %v524, %v526
        %v531 = vadd.s32 %v527, 1
        %v532 = vsel %vm530, %v531, %v527
        %v533 = vadd.s32 %v528, %v532
        %v534 = vadd.s32 %v533, 536870912
        %v535 = vshrl.u32 %v534, 30
        %v536 = vshll.u32 %v535, 30
        %v537 = vsub.s32 %v533, %v536
        %vm538 = vcmp.lt.s32.totalorder %v537, 0
        %v539 = vsub.s32 0, %v537
        %v540 = vsel %vm538, %v539, %v537
        %v541 = vclz %v540
        %v542 = vsub.s32 %v541, 2
        %vm543 = vcmp.gt.s32.totalorder 0, %v542
        %v544 = vsel %vm543, 0, %v542
        %v545 = vsub.s32 32, %v544
        %v546 = vshll.u32 %v537, %v544
        %v547 = vshrl.u32 %v529, %v545
        %v548 = vor.u32 %v546, %v547
        %v549 = vsub.s32 4294967266, %v544
        %v550 = vadd.s32 %v549, 127
        %v551 = vshll.u32 %v550, 23
        %v552 = vor.u32 4788187, %v551
        %v553 = vand.u32 2147483647, %v552
        %v555 = vcvt.s32.f32 %v548
        %v556 = vmul.f32 %v555, %v553
        %v557 = vxor.u32 %v556, 2147483648
        %v558 = vsel %vm475, %v557, %v556
        %v559 = vsub.s32 4, %v535
        %v560 = vsel %vm475, %v559, %v535
        %v561 = vsel %vm474, %v159, %v558
        %v562 = vsel %vm474, 0, %v560
        %v563 = vcosq.f32.pop %v561
        %v564 = vsinq.f32.pop %v561
        %vm565 = vweird.f32 %v159
        %v566 = vand.u32 %v562, 3
        %vm567 = vcmp.lt.s32.totalorder %v566, 2
        %vm568 = vcmp.eq.s32.totalorder %v566, 0
        %v569 = vxor.u32 %v564, 2147483648
        %v570 = vsel %vm568, %v563, %v569
        %vm571 = vcmp.eq.s32.totalorder %v566, 2
        %v572 = vxor.u32 %v563, 2147483648
        %v573 = vsel %vm571, %v572, %v564
        %v574 = vsel %vm567, %v570, %v573
        %v575 = vsel %vm565, nan, %v574
        %576 = vst [vmem:[%s134 + $0x10] sm:$0xff] %v472
        %577 = vst [vmem:[%s134 + $0x18] sm:$0xff] %v575
        %s578 = sand.u32 %s71, 1
        %s579 = scalar_lea.sflag [#allocation3], %s578
        %s580 = sand.u32 %s71, 1
        %s581 = smul.addr %s580, 32
        %s582 = scalar_lea.vmem [#allocation2], %s581
        // Predicated region
        $region29: #{tpu_custom_call.1} parent=27 // pred_check
          %p583 = pneg %p81
        $region30: #{tpu_custom_call.1} parent=27 // pred_check_branch
          %585 = sbr.rel (%p583) target = $region32
        $region31: #{tpu_custom_call.1} parent=27 // pred_region
          %s587 = ssub.s32 512, 512
          %588 = vsyncadd %s579, %s587
          %s589 = smul.addr %s16, 4
          %s590 = smul.addr %s589, 128
          %s591 = scalar_lea.hbm %s2, %s590
          %s593 = sshll.u32 %s582, 4
          %s594 = int_to_ptr.vmem [resolvable:$true] %s593
          %596 = dma.vmem_to_hbm [thread:$0]  %s594, 512, %s591, %s579
        $region32: #{tpu_custom_call.1} parent=27 // pred_fallthru
          _
      $region28: #{tpu_custom_call.1} parent=5 // pred_fallthru
        _
      %p597 = scmp.le.s32.totalorder 2, %s11
      // Predicated region
      $region33: #{tpu_custom_call.1} parent=5 // pred_check
        %p598 = pneg %p597
      $region34: #{tpu_custom_call.1} parent=5 // pred_check_branch
        %600 = sbr.rel (%p598) target = $region36
      $region35: #{tpu_custom_call.1} parent=5 // pred_region
        %s601 = ssub.s32 %s11, 2
        // Predicated region
        $region37: #{tpu_custom_call.1} parent=35 // pred_check
          %p602 = pneg %p87
        $region38: #{tpu_custom_call.1} parent=35 // pred_check_branch
          %604 = sbr.rel (%p602) target = $region40
        $region39: #{tpu_custom_call.1} parent=35 // pred_region
          %s605 = sand.u32 %s72, 1
          %s606 = scalar_lea.sflag [#allocation3], %s605
          %s607 = sand.u32 %s72, 1
          %s608 = smul.addr %s607, 32
          %s609 = scalar_lea.vmem [#allocation2], %s608
          %610 = dma.done %s606, 512
        $region40: #{tpu_custom_call.1} parent=35 // pred_fallthru
          _
      $region36: #{tpu_custom_call.1} parent=5 // pred_fallthru
        _
    $region6: #{tpu_custom_call.1} parent=1 // loop_footer
      %s15 = sadd.s32 1, %s11
    $region7: #{tpu_custom_call.1} parent=1 // loop_footer_branch
      %10 = sbr.rel target = $region3
    $region8: #{tpu_custom_call.1} parent=1 // loop_exit
      _
    %611 = vsyncpa [#allocation3], 1
    %s612 = scalar_lea.sflag [#allocation3], 1
    %613 = vsyncpa %s612, 1

</llo_original>
